<compile_context>
chip_gen: v6e
topology: v6e:2x2x1
jax: 0.10.0
libtpu: 0.0.40
codegen_flags: <defaults>
</compile_context>

<pallas_src>
import jax
import jax.numpy as jnp
from jax import lax
from jax.experimental import pallas as pl
from jax.experimental.pallas import tpu as pltpu


def cross_attention_kernel(img_ref, dep_ref, wq_ref, bq_ref, wk_ref, bk_ref,
                           wv_ref, bv_ref, mask_ref, gamma_ref, out_ref):
    """One grid step processes TB samples stacked along the sublane axis.

    img_ref / out_ref : (TB*c1, HW)        dep_ref : (TB*c2, HW)
    wq_ref : (TB*c1, TB*c1)  block-diag kron(I, Wq)     bq_ref : (TB*c1, 1)
    wk_ref, wv_ref : (TB*c2, TB*c2)                     bk_ref, bv_ref : (TB*c2, 1)
    mask_ref : (TB*c1, TB*c2) block-diagonal 1/0 mask (f32)
    gamma_ref : SMEM (1,)
    """
    x = img_ref[...].astype(jnp.float32)          # (TB*c1, HW)
    d = dep_ref[...].astype(jnp.float32)          # (TB*c2, HW)

    # 1x1 convs for all TB samples at once via block-diagonal weights:
    # one wide MXU matmul per projection (no per-sample loop).
    q = jnp.dot(wq_ref[...], x, preferred_element_type=jnp.float32) + bq_ref[...]
    k = jnp.dot(wk_ref[...], d, preferred_element_type=jnp.float32) + bk_ref[...]
    v = jnp.dot(wv_ref[...], d, preferred_element_type=jnp.float32) + bv_ref[...]

    # Stacked scores: (TB*c1, TB*c2); only the diagonal (per-sample) blocks
    # are meaningful, the mask removes cross-sample terms exactly.
    att = lax.dot_general(q, k,
                          dimension_numbers=(((1,), (1,)), ((), ())),
                          preferred_element_type=jnp.float32)
    on_block = mask_ref[...] > 0.5
    att = jnp.where(on_block, att, jnp.float32(-1e30))
    att = att - jnp.max(att, axis=-1, keepdims=True)
    p = jnp.where(on_block, jnp.exp(att), 0.0)
    # Softmax denominator via EUP approximate reciprocal (frees the VALU).
    p = p * pl.reciprocal(jnp.sum(p, axis=-1, keepdims=True), approx=True)

    # Off-block entries of p are exactly 0, so this equals the per-sample
    # att_b @ v_b stacked along rows.
    o = jnp.dot(p, v, preferred_element_type=jnp.float32)        # (TB*c1, HW)

    out_ref[...] = (gamma_ref[0] * o + x).astype(out_ref.dtype)


def _pick_tb(B, c1, c2, hw, *, target_rows=256, vmem_budget=8 * 1024 * 1024):
    """Samples per grid step.

    Constraints: TB divides B; TB*c1 and TB*c2 are sublane-aligned (multiple
    of 8) unless TB == B (full-extent block); block-diag weights + slabs fit a
    modest VMEM budget.  Prefer the largest TB that still leaves >= 2 grid
    steps (dual-TensorCore sharding)."""
    aligned = []
    for tb in range(1, B + 1):
        if B % tb:
            continue
        if tb != B and ((tb * c1) % 8 or (tb * c2) % 8):
            continue
        aligned.append(tb)

    def step_bytes(tb):
        slab = tb * (2 * c1 + c2) * hw * 4 * 2                 # in+out, dbl-buffered
        wgt = ((tb * c1) ** 2 + 2 * (tb * c2) ** 2
               + (tb * c1) * (tb * c2) + tb * (c1 + 2 * c2)) * 4
        return slab + wgt

    sized = [tb for tb in aligned
             if tb * max(c1, c2) <= target_rows and step_bytes(tb) <= vmem_budget]
    if not sized:
        return min(aligned)
    multi = [tb for tb in sized if B // tb >= 2]
    return max(multi) if multi else max(sized)


def cross_attention(img_feat, depth_feat, params, *, tb=None):
    batch, seq, c1, h, w = img_feat.shape
    _, _, c2, _, _ = depth_feat.shape
    B, HW = batch * seq, h * w
    wq, bq, wk, bk, wv, bv, gamma = params

    if tb is None:
        tb = _pick_tb(B, c1, c2, HW)
    if B % tb or (tb != B and ((tb * c1) % 8 or (tb * c2) % 8)):
        tb = B
    n_steps = B // tb
    rows_q, rows_kv = tb * c1, tb * c2

    f32 = jnp.float32
    eye = jnp.eye(tb, dtype=f32)
    # Block-diagonal 1x1-conv weights / tiled biases / block-diag softmax mask
    # (tiny, built once per call in the wrapper; fetched into VMEM once).
    wq_big = jnp.kron(eye, wq.astype(f32))
    wk_big = jnp.kron(eye, wk.astype(f32))
    wv_big = jnp.kron(eye, wv.astype(f32))
    bq_big = jnp.tile(bq.astype(f32).reshape(c1, 1), (tb, 1))
    bk_big = jnp.tile(bk.astype(f32).reshape(c2, 1), (tb, 1))
    bv_big = jnp.tile(bv.astype(f32).reshape(c2, 1), (tb, 1))
    mask = jnp.kron(eye, jnp.ones((c1, c2), f32))

    # Contiguous (free) reshapes — no HBM transpose passes.
    img2d = img_feat.reshape(B * c1, HW)
    dep2d = depth_feat.reshape(B * c2, HW)

    out = pl.pallas_call(
        cross_attention_kernel,
        out_shape=jax.ShapeDtypeStruct((B * c1, HW), img_feat.dtype),
        grid_spec=pltpu.PrefetchScalarGridSpec(
            num_scalar_prefetch=0,
            grid=(n_steps,),
            in_specs=[
                pl.BlockSpec((rows_q, HW), lambda i: (i, 0)),        # img slab
                pl.BlockSpec((rows_kv, HW), lambda i: (i, 0)),       # depth slab
                pl.BlockSpec((rows_q, rows_q), lambda i: (0, 0)),    # Wq (blockdiag)
                pl.BlockSpec((rows_q, 1), lambda i: (0, 0)),         # bq
                pl.BlockSpec((rows_kv, rows_kv), lambda i: (0, 0)),  # Wk
                pl.BlockSpec((rows_kv, 1), lambda i: (0, 0)),        # bk
                pl.BlockSpec((rows_kv, rows_kv), lambda i: (0, 0)),  # Wv
                pl.BlockSpec((rows_kv, 1), lambda i: (0, 0)),        # bv
                pl.BlockSpec((rows_q, rows_kv), lambda i: (0, 0)),   # softmax mask
                pl.BlockSpec(memory_space=pltpu.MemorySpace.SMEM),   # gamma
            ],
            out_specs=pl.BlockSpec((rows_q, HW), lambda i: (i, 0)),
        ),
        compiler_params=pltpu.CompilerParams(
            dimension_semantics=("parallel",),
            vmem_limit_bytes=32 * 1024 * 1024),
    )(img2d, dep2d, wq_big, bq_big, wk_big, bk_big, wv_big, bv_big, mask,
      gamma.astype(f32))

    return out.reshape(batch, seq, c1, h, w)


def cross_attention_reference(img_feat, depth_feat, params):
    """Pure-JAX reference mirroring the PyTorch forward pass."""
    batch, seq, c1, h, w = img_feat.shape
    _, _, c2, _, _ = depth_feat.shape
    B, HW = batch * seq, h * w
    wq, bq, wk, bk, wv, bv, gamma = params
    x = img_feat.reshape(B, c1, HW).astype(jnp.float32)
    d = depth_feat.reshape(B, c2, HW).astype(jnp.float32)
    q = jnp.einsum('oc,bcp->bop', wq, x) + bq[None]
    k = jnp.einsum('oc,bcp->bop', wk, d) + bk[None]
    v = jnp.einsum('oc,bcp->bop', wv, d) + bv[None]
    att = jax.nn.softmax(jnp.einsum('bcp,bdp->bcd', q, k), axis=-1)
    o = jnp.einsum('bcd,bdp->bcp', att, v)
    out = gamma[0] * o + x
    return out.reshape(batch, seq, c1, h, w).astype(img_feat.dtype)


if __name__ == "__main__":
    key = jax.random.PRNGKey(0)
    batch, seq, c1, c2, h, w = 2, 2, 8, 8, 8, 8

    (k_img, k_dep, k_wq, k_bq, k_wk, k_bk, k_wv, k_bv) = jax.random.split(key, 8)

    img_feat = jax.random.normal(k_img, (batch, seq, c1, h, w), jnp.float32)
    depth_feat = jax.random.normal(k_dep, (batch, seq, c2, h, w), jnp.float32)

    # Parameters (Conv2d 1x1 weights folded to (out_ch, in_ch); biases kept as
    # (C, 1) for spatial broadcast inside the kernel).
    scale = 0.1
    wq = scale * jax.random.normal(k_wq, (c1, c1), jnp.float32)
    bq = scale * jax.random.normal(k_bq, (c1, 1), jnp.float32)
    wk = scale * jax.random.normal(k_wk, (c2, c2), jnp.float32)
    bk = scale * jax.random.normal(k_bk, (c2, 1), jnp.float32)
    wv = scale * jax.random.normal(k_wv, (c2, c2), jnp.float32)
    bv = scale * jax.random.normal(k_bv, (c2, 1), jnp.float32)
    # PyTorch inits gamma to zeros; use a nonzero value here so the attention
    # path actually contributes to the output under test.
    gamma = jnp.array([0.5], jnp.float32)

    params = (wq, bq, wk, bk, wv, bv, gamma)

    out = jax.block_until_ready(cross_attention(img_feat, depth_feat, params))
    ref = jax.block_until_ready(
        cross_attention_reference(img_feat, depth_feat, params))

    assert out.shape == (batch, seq, c1, h, w)
    # Tolerance accommodates the EUP approximate reciprocal used for the
    # softmax normalization; layout/indexing bugs would produce O(1) errors.
    assert jnp.allclose(out, ref, atol=5e-3, rtol=5e-3), (
        f"max abs err = {jnp.max(jnp.abs(out - ref))}")

    print("KERNEL_OK")
</pallas_src>

<mosaic_0001>
module attributes {stable_mosaic.version = 11 : i64} {
  func.func @cross_attention_kernel(%arg0: i32, %arg1: memref<16x64xf32, #tpu.memory_space<vmem>>, %arg2: memref<16x64xf32, #tpu.memory_space<vmem>>, %arg3: memref<16x16xf32, #tpu.memory_space<vmem>>, %arg4: memref<16x1xf32, #tpu.memory_space<vmem>>, %arg5: memref<16x16xf32, #tpu.memory_space<vmem>>, %arg6: memref<16x1xf32, #tpu.memory_space<vmem>>, %arg7: memref<16x16xf32, #tpu.memory_space<vmem>>, %arg8: memref<16x1xf32, #tpu.memory_space<vmem>>, %arg9: memref<16x16xf32, #tpu.memory_space<vmem>>, %arg10: memref<1xf32, #tpu.memory_space<smem>>, %arg11: memref<16x64xf32, #tpu.memory_space<vmem>>) attributes {dimension_semantics = [#tpu.dimension_semantics<parallel>], iteration_bounds = array<i64: 2>, scalar_prefetch = 0 : i64, scratch_operands = 0 : i64, tpu.core_type = #tpu.core_type<tc>, window_params = [{transform_indices = @transform_0, window_bounds = array<i64: 16, 64>}, {transform_indices = @transform_1, window_bounds = array<i64: 16, 64>}, {pipeline_mode = #tpu.pipeline_mode<synchronous>, transform_indices = @transform_2, window_bounds = array<i64: 16, 16>}, {pipeline_mode = #tpu.pipeline_mode<synchronous>, transform_indices = @transform_3, window_bounds = array<i64: 16, 1>}, {pipeline_mode = #tpu.pipeline_mode<synchronous>, transform_indices = @transform_4, window_bounds = array<i64: 16, 16>}, {pipeline_mode = #tpu.pipeline_mode<synchronous>, transform_indices = @transform_5, window_bounds = array<i64: 16, 1>}, {pipeline_mode = #tpu.pipeline_mode<synchronous>, transform_indices = @transform_6, window_bounds = array<i64: 16, 16>}, {pipeline_mode = #tpu.pipeline_mode<synchronous>, transform_indices = @transform_7, window_bounds = array<i64: 16, 1>}, {pipeline_mode = #tpu.pipeline_mode<synchronous>, transform_indices = @transform_8, window_bounds = array<i64: 16, 16>}, {transform_indices = @transform_9, window_bounds = array<i64: 1>}, {transform_indices = @transform_10, window_bounds = array<i64: 16, 64>}]} {
    %c0 = arith.constant 0 : index
    %c0_0 = arith.constant 0 : index
    %0 = vector.load %arg1[%c0, %c0_0] : memref<16x64xf32, #tpu.memory_space<vmem>>, vector<16x64xf32>
    %c0_1 = arith.constant 0 : index
    %c0_2 = arith.constant 0 : index
    %1 = vector.load %arg2[%c0_1, %c0_2] : memref<16x64xf32, #tpu.memory_space<vmem>>, vector<16x64xf32>
    %c0_3 = arith.constant 0 : index
    %c0_4 = arith.constant 0 : index
    %2 = vector.load %arg3[%c0_3, %c0_4] : memref<16x16xf32, #tpu.memory_space<vmem>>, vector<16x16xf32>
    %cst = arith.constant dense<0.000000e+00> : vector<16x64xf32>
    %3 = tpu.matmul %2, %0, %cst {dimension_numbers = #tpu.dot_dimension_numbers<[1], [0], [0], [1], [0, 0, 1, 1], [], []>} : vector<16x16xf32>, vector<16x64xf32>, vector<16x64xf32> -> vector<16x64xf32>
    %c0_5 = arith.constant 0 : index
    %c0_6 = arith.constant 0 : index
    %4 = vector.load %arg4[%c0_5, %c0_6] : memref<16x1xf32, #tpu.memory_space<vmem>>, vector<16x1xf32>
    %5 = vector.broadcast %4 : vector<16x1xf32> to vector<16x64xf32>
    %6 = arith.addf %3, %5 : vector<16x64xf32>
    %c0_7 = arith.constant 0 : index
    %c0_8 = arith.constant 0 : index
    %7 = vector.load %arg5[%c0_7, %c0_8] : memref<16x16xf32, #tpu.memory_space<vmem>>, vector<16x16xf32>
    %cst_9 = arith.constant dense<0.000000e+00> : vector<16x64xf32>
    %8 = tpu.matmul %7, %1, %cst_9 {dimension_numbers = #tpu.dot_dimension_numbers<[1], [0], [0], [1], [0, 0, 1, 1], [], []>} : vector<16x16xf32>, vector<16x64xf32>, vector<16x64xf32> -> vector<16x64xf32>
    %c0_10 = arith.constant 0 : index
    %c0_11 = arith.constant 0 : index
    %9 = vector.load %arg6[%c0_10, %c0_11] : memref<16x1xf32, #tpu.memory_space<vmem>>, vector<16x1xf32>
    %10 = vector.broadcast %9 : vector<16x1xf32> to vector<16x64xf32>
    %11 = arith.addf %8, %10 : vector<16x64xf32>
    %c0_12 = arith.constant 0 : index
    %c0_13 = arith.constant 0 : index
    %12 = vector.load %arg7[%c0_12, %c0_13] : memref<16x16xf32, #tpu.memory_space<vmem>>, vector<16x16xf32>
    %cst_14 = arith.constant dense<0.000000e+00> : vector<16x64xf32>
    %13 = tpu.matmul %12, %1, %cst_14 {dimension_numbers = #tpu.dot_dimension_numbers<[1], [0], [0], [1], [0, 0, 1, 1], [], []>} : vector<16x16xf32>, vector<16x64xf32>, vector<16x64xf32> -> vector<16x64xf32>
    %c0_15 = arith.constant 0 : index
    %c0_16 = arith.constant 0 : index
    %14 = vector.load %arg8[%c0_15, %c0_16] : memref<16x1xf32, #tpu.memory_space<vmem>>, vector<16x1xf32>
    %15 = vector.broadcast %14 : vector<16x1xf32> to vector<16x64xf32>
    %16 = arith.addf %13, %15 : vector<16x64xf32>
    %cst_17 = arith.constant dense<0.000000e+00> : vector<16x16xf32>
    %17 = tpu.matmul %6, %11, %cst_17 {dimension_numbers = #tpu.dot_dimension_numbers<[1], [1], [0], [0], [0, 0, 1, 0], [], []>} : vector<16x64xf32>, vector<16x64xf32>, vector<16x16xf32> -> vector<16x16xf32>
    %c0_18 = arith.constant 0 : index
    %c0_19 = arith.constant 0 : index
    %18 = vector.load %arg9[%c0_18, %c0_19] : memref<16x16xf32, #tpu.memory_space<vmem>>, vector<16x16xf32>
    %cst_20 = arith.constant 5.000000e-01 : f32
    %19 = vector.broadcast %cst_20 : f32 to vector<16x16xf32>
    %20 = arith.cmpf ogt, %18, %19 : vector<16x16xf32>
    %cst_21 = arith.constant -1.000000e+30 : f32
    %21 = vector.broadcast %cst_21 : f32 to vector<16x16xf32>
    %22 = arith.select %20, %17, %21 : vector<16x16xi1>, vector<16x16xf32>
    %cst_22 = arith.constant dense<0xFF800000> : vector<16xf32>
    %23 = vector.multi_reduction <maximumf>, %22, %cst_22 [1] : vector<16x16xf32> to vector<16xf32>
    %24 = vector.shape_cast %23 : vector<16xf32> to vector<16x1xf32>
    %25 = vector.broadcast %24 : vector<16x1xf32> to vector<16x16xf32>
    %26 = arith.subf %22, %25 : vector<16x16xf32>
    %27 = math.exp %26 : vector<16x16xf32>
    %cst_23 = arith.constant 0.000000e+00 : f32
    %28 = vector.broadcast %cst_23 : f32 to vector<16x16xf32>
    %29 = arith.select %20, %27, %28 : vector<16x16xi1>, vector<16x16xf32>
    %cst_24 = arith.constant dense<0.000000e+00> : vector<16xf32>
    %30 = vector.multi_reduction <add>, %29, %cst_24 [1] : vector<16x16xf32> to vector<16xf32>
    %31 = vector.shape_cast %30 : vector<16xf32> to vector<16x1xf32>
    %32 = tpu.reciprocal %31 {approx = true} : vector<16x1xf32> -> vector<16x1xf32>
    %33 = vector.broadcast %32 : vector<16x1xf32> to vector<16x16xf32>
    %34 = arith.mulf %29, %33 : vector<16x16xf32>
    %cst_25 = arith.constant dense<0.000000e+00> : vector<16x64xf32>
    %35 = tpu.matmul %34, %16, %cst_25 {dimension_numbers = #tpu.dot_dimension_numbers<[1], [0], [0], [1], [0, 0, 1, 1], [], []>} : vector<16x16xf32>, vector<16x64xf32>, vector<16x64xf32> -> vector<16x64xf32>
    %c0_26 = arith.constant 0 : index
    %36 = memref.load %arg10[%c0_26] : memref<1xf32, #tpu.memory_space<smem>>
    %37 = vector.broadcast %36 : f32 to vector<16x64xf32>
    %38 = arith.mulf %37, %35 : vector<16x64xf32>
    %39 = arith.addf %38, %0 : vector<16x64xf32>
    %c0_27 = arith.constant 0 : index
    %c0_28 = arith.constant 0 : index
    %40 = vector.load %arg11[%c0_27, %c0_28] : memref<16x64xf32, #tpu.memory_space<vmem>>, vector<16x64xf32>
    tpu.vector_store %arg11[%c0_27, %c0_28], %39 {strides = array<i32>} : memref<16x64xf32, #tpu.memory_space<vmem>>, vector<16x64xf32>,
    return
  }
  func.func @transform_0(%arg0: i32) -> (i32, i32) {
    %c0_i32 = arith.constant 0 : i32
    %c0_i32_0 = arith.constant 0 : i32
    return %arg0, %c0_i32 : i32, i32
  }
  func.func @transform_1(%arg0: i32) -> (i32, i32) {
    %c0_i32 = arith.constant 0 : i32
    %c0_i32_0 = arith.constant 0 : i32
    return %arg0, %c0_i32 : i32, i32
  }
  func.func @transform_2(%arg0: i32) -> (i32, i32) {
    %c0_i32 = arith.constant 0 : i32
    %c0_i32_0 = arith.constant 0 : i32
    %c0_i32_1 = arith.constant 0 : i32
    return %c0_i32, %c0_i32_0 : i32, i32
  }
  func.func @transform_3(%arg0: i32) -> (i32, i32) {
    %c0_i32 = arith.constant 0 : i32
    %c0_i32_0 = arith.constant 0 : i32
    %c0_i32_1 = arith.constant 0 : i32
    return %c0_i32, %c0_i32_0 : i32, i32
  }
  func.func @transform_4(%arg0: i32) -> (i32, i32) {
    %c0_i32 = arith.constant 0 : i32
    %c0_i32_0 = arith.constant 0 : i32
    %c0_i32_1 = arith.constant 0 : i32
    return %c0_i32, %c0_i32_0 : i32, i32
  }
  func.func @transform_5(%arg0: i32) -> (i32, i32) {
    %c0_i32 = arith.constant 0 : i32
    %c0_i32_0 = arith.constant 0 : i32
    %c0_i32_1 = arith.constant 0 : i32
    return %c0_i32, %c0_i32_0 : i32, i32
  }
  func.func @transform_6(%arg0: i32) -> (i32, i32) {
    %c0_i32 = arith.constant 0 : i32
    %c0_i32_0 = arith.constant 0 : i32
    %c0_i32_1 = arith.constant 0 : i32
    return %c0_i32, %c0_i32_0 : i32, i32
  }
  func.func @transform_7(%arg0: i32) -> (i32, i32) {
    %c0_i32 = arith.constant 0 : i32
    %c0_i32_0 = arith.constant 0 : i32
    %c0_i32_1 = arith.constant 0 : i32
    return %c0_i32, %c0_i32_0 : i32, i32
  }
  func.func @transform_8(%arg0: i32) -> (i32, i32) {
    %c0_i32 = arith.constant 0 : i32
    %c0_i32_0 = arith.constant 0 : i32
    %c0_i32_1 = arith.constant 0 : i32
    return %c0_i32, %c0_i32_0 : i32, i32
  }
  func.func @transform_9(%arg0: i32) -> i32 {
    %c0_i32 = arith.constant 0 : i32
    %c0_i32_0 = arith.constant 0 : i32
    return %c0_i32 : i32
  }
  func.func @transform_10(%arg0: i32) -> (i32, i32) {
    %c0_i32 = arith.constant 0 : i32
    %c0_i32_0 = arith.constant 0 : i32
    return %arg0, %c0_i32 : i32, i32
  }
}

</mosaic_0001>

<llo_original>
// kernel: tpu_custom_call.1
$region0: #{tpu_custom_call.1}
  #allocation0 [shape = 'u32[]', space=smem, size = 0x4, offset = 0x4, fixed_abs, tag = 'smem constant byte address 0x4 - core index']
  #allocation1 [shape = 'u32[144,128]{1,0:T(1,128)}', space=vmem, size = 0x12000, scoped, tag = 'internal scratch']
  #allocation2 [shape = 'f32[1]{0:T(128)S(6)}', space=smem, size = 0x200, scoped, tag = 'scoped memory for tpu_custom_call.1']
  %s0 = inlined_call_operand.vmem [shape: f32[32,64], index: 0, kind: input, shape index: {}]
  %s1 = inlined_call_operand.hbm [shape: f32[32,64], index: 1, kind: input, shape index: {}]
  %s2 = inlined_call_operand.vmem [shape: f32[16,16], index: 2, kind: input, shape index: {}]
  %s3 = inlined_call_operand.vmem [shape: f32[16,1], index: 3, kind: input, shape index: {}]
  %s4 = inlined_call_operand.hbm [shape: f32[16,16], index: 4, kind: input, shape index: {}]
  %s5 = inlined_call_operand.vmem [shape: f32[16,1], index: 5, kind: input, shape index: {}]
  %s6 = inlined_call_operand.hbm [shape: f32[16,16], index: 6, kind: input, shape index: {}]
  %s7 = inlined_call_operand.vmem [shape: f32[16,1], index: 7, kind: input, shape index: {}]
  %s8 = inlined_call_operand.vmem [shape: f32[16,16], index: 8, kind: input, shape index: {}]
  %s9 = inlined_call_operand.<no memory space> [shape: f32[1], index: 9, kind: input, shape index: {}]
  %s10 = inlined_call_operand.hbm [shape: f32[32,64], index: 10, kind: output, shape index: {}]
  %s11 = sld [smem:[#allocation0]]
  $region85: #{tpu_custom_call.1} parent=0
    _
  %s13 = ssub.s32 1, %s11
  %s14 = scalar_select 0, %s13, %s11
  %15 = sst [smem:[#allocation2]] %s9
  $region1: #{tpu_custom_call.1} parent=0
    #allocation3 [shape = 'u8[16384]{0}', space=vmem, size = 0x4000, scoped, tag = 'input window, operand 1']
    #allocation4 [shape = 's32[2]{0}', space=sflag, size = 0x8, scoped, tag = 'scoped memory for tpu_custom_call.1']
    #allocation5 [shape = 's32[2]{0}', space=sflag, size = 0x8, scoped, tag = 'scoped memory for tpu_custom_call.1']
    #allocation6 [shape = 'u8[8192]{0}', space=vmem, size = 0x2000, scoped, tag = 'input window, operand 4, single buffered']
    #allocation7 [shape = 's32[1]{0}', space=sflag, size = 0x4, scoped, tag = 'scoped memory for tpu_custom_call.1']
    #allocation8 [shape = 'u8[8192]{0}', space=vmem, size = 0x2000, scoped, tag = 'input window, operand 6, single buffered']
    #allocation9 [shape = 'u8[16384]{0}', space=vmem, size = 0x4000, scoped, tag = 'output window, operand 0']
    %16 = vsyncpa [#allocation4], 0
    %s17 = scalar_lea.sflag [#allocation4], 1
    %18 = vsyncpa %s17, 0
    %19 = vsyncpa [#allocation7], 0
    %20 = vsyncpa [#allocation5], 0
    %s21 = scalar_lea.sflag [#allocation5], 1
    %22 = vsyncpa %s21, 0
    loop: start=0, step=1, limit=4
    $region2: #{tpu_custom_call.1} parent=1 // loop_pre_header
      _
    $region3: #{tpu_custom_call.1} parent=1 // loop_header
      %s24 = sphi 0, %s28
      %p25 = scmp.ge.s32.totalorder %s24, 4
      %s34 = sphi 0, %s36
      %s37 = sphi 0, %s34
      %s38 = sphi 0, %s37
      %s54 = sphi 0, %s38
      %s60 = sphi 0, %s62
      %s63 = sphi 0, %s60
      %s64 = sphi 0, %s63
      %s80 = sphi 0, %s64
      %s84 = sphi 0, %s84
      %s86 = sphi 0, %s84
      %s87 = sphi 0, %s86
      %s101 = sphi 0, %s87
      %s105 = sphi 0, %s105
      %s107 = sphi 0, %s105
      %s108 = sphi 0, %s107
      %s122 = sphi 0, %s108
      %s126 = sphi 0, %s126
      %s128 = sphi 0, %s126
      %s129 = sphi 0, %s128
      %s143 = sphi 0, %s129
      %s147 = sphi 0, %s147
      %s149 = sphi 0, %s147
      %s150 = sphi 0, %s149
      %s164 = sphi 0, %s150
      %s168 = sphi 0, %s168
      %s170 = sphi 0, %s168
      %s171 = sphi 0, %s170
      %s185 = sphi 0, %s171
      %s189 = sphi 0, %s189
      %s191 = sphi 0, %s189
      %s192 = sphi 0, %s191
      %s206 = sphi 0, %s192
      %s210 = sphi 0, %s210
      %s212 = sphi 0, %s210
      %s213 = sphi 0, %s212
      %s227 = sphi 0, %s213
      %s231 = sphi 0, %s231
      %s233 = sphi 0, %s231
      %s234 = sphi 0, %s233
      %s248 = sphi 0, %s234
      %s254 = sphi 0, %s256
      %s257 = sphi 0, %s254
      %s258 = sphi 0, %s257
      %s274 = sphi 0, %s258
    $region4: #{tpu_custom_call.1} parent=1 // loop_header_branch
      %27 = sbr.rel (%p25) target = $region8
    $region5: #{tpu_custom_call.1} parent=1 // loop_body
      %s29 = ssub.s32 %s24, 1
      %s30 = ssub.s32 %s24, 2
      %s31 = sadd.s32 %s24, 1
      %s32 = ssub.s32 %s24, %s31
      %p33 = scmp.eq.s32.totalorder %s32, 0
      %s35 = sadd.s32 %s34, 1
      %s36 = scalar_select %p33, %s34, %s35
      %p39 = pneg %p33
      %p40 = scmp.eq.s32.totalorder %s24, 1
      %p41 = por %p39, %p40
      %p42 = scmp.ne.s32.totalorder %s34, %s37
      %p43 = scmp.eq.s32.totalorder %s24, 0
      %p44 = por %p42, %p43
      %p45 = scmp.ne.s32.totalorder %s34, %s37
      %p46 = scmp.eq.s32.totalorder %s29, 1
      %p47 = por %p45, %p46
      %p48 = scmp.ne.s32.totalorder %s37, %s38
      %p49 = scmp.eq.s32.totalorder %s29, 0
      %p50 = por %p48, %p49
      %p51 = scmp.ne.s32.totalorder %s37, %s38
      %p52 = scmp.eq.s32.totalorder %s30, 1
      %p53 = por %p51, %p52
      %p55 = scmp.ne.s32.totalorder %s38, %s54
      %p56 = scmp.eq.s32.totalorder %s30, 0
      %p57 = por %p55, %p56
      %s58 = ssub.s32 %s24, %s31
      %p59 = scmp.eq.s32.totalorder %s58, 0
      %s61 = sadd.s32 %s60, 1
      %s62 = scalar_select %p59, %s60, %s61
      %p65 = pneg %p59
      %p66 = scmp.eq.s32.totalorder %s24, 1
      %p67 = por %p65, %p66
      %p68 = scmp.ne.s32.totalorder %s60, %s63
      %p69 = scmp.eq.s32.totalorder %s24, 0
      %p70 = por %p68, %p69
      %p71 = scmp.ne.s32.totalorder %s60, %s63
      %p72 = scmp.eq.s32.totalorder %s29, 1
      %p73 = por %p71, %p72
      %p74 = scmp.ne.s32.totalorder %s63, %s64
      %p75 = scmp.eq.s32.totalorder %s29, 0
      %p76 = por %p74, %p75
      %p77 = scmp.ne.s32.totalorder %s63, %s64
      %p78 = scmp.eq.s32.totalorder %s30, 1
      %p79 = por %p77, %p78
      %p81 = scmp.ne.s32.totalorder %s64, %s80
      %p82 = scmp.eq.s32.totalorder %s30, 0
      %p83 = por %p81, %p82
      %s85 = sadd.s32 %s84, 1
      %p88 = scmp.eq.s32.totalorder %s24, 1
      %p89 = scmp.ne.s32.totalorder %s84, %s86
      %p90 = scmp.eq.s32.totalorder %s24, 0
      %p91 = por %p89, %p90
      %p92 = scmp.ne.s32.totalorder %s84, %s86
      %p93 = scmp.eq.s32.totalorder %s29, 1
      %p94 = por %p92, %p93
      %p95 = scmp.ne.s32.totalorder %s86, %s87
      %p96 = scmp.eq.s32.totalorder %s29, 0
      %p97 = por %p95, %p96
      %p98 = scmp.ne.s32.totalorder %s86, %s87
      %p99 = scmp.eq.s32.totalorder %s30, 1
      %p100 = por %p98, %p99
      %p102 = scmp.ne.s32.totalorder %s87, %s101
      %p103 = scmp.eq.s32.totalorder %s30, 0
      %p104 = por %p102, %p103
      %s106 = sadd.s32 %s105, 1
      %p109 = scmp.eq.s32.totalorder %s24, 1
      %p110 = scmp.ne.s32.totalorder %s105, %s107
      %p111 = scmp.eq.s32.totalorder %s24, 0
      %p112 = por %p110, %p111
      %p113 = scmp.ne.s32.totalorder %s105, %s107
      %p114 = scmp.eq.s32.totalorder %s29, 1
      %p115 = por %p113, %p114
      %p116 = scmp.ne.s32.totalorder %s107, %s108
      %p117 = scmp.eq.s32.totalorder %s29, 0
      %p118 = por %p116, %p117
      %p119 = scmp.ne.s32.totalorder %s107, %s108
      %p120 = scmp.eq.s32.totalorder %s30, 1
      %p121 = por %p119, %p120
      %p123 = scmp.ne.s32.totalorder %s108, %s122
      %p124 = scmp.eq.s32.totalorder %s30, 0
      %p125 = por %p123, %p124
      %s127 = sadd.s32 %s126, 1
      %p130 = scmp.eq.s32.totalorder %s24, 1
      %p131 = scmp.ne.s32.totalorder %s126, %s128
      %p132 = scmp.eq.s32.totalorder %s24, 0
      %p133 = por %p131, %p132
      %p134 = scmp.ne.s32.totalorder %s126, %s128
      %p135 = scmp.eq.s32.totalorder %s29, 1
      %p136 = por %p134, %p135
      %p137 = scmp.ne.s32.totalorder %s128, %s129
      %p138 = scmp.eq.s32.totalorder %s29, 0
      %p139 = por %p137, %p138
      %p140 = scmp.ne.s32.totalorder %s128, %s129
      %p141 = scmp.eq.s32.totalorder %s30, 1
      %p142 = por %p140, %p141
      %p144 = scmp.ne.s32.totalorder %s129, %s143
      %p145 = scmp.eq.s32.totalorder %s30, 0
      %p146 = por %p144, %p145
      %s148 = sadd.s32 %s147, 1
      %p151 = scmp.eq.s32.totalorder %s24, 1
      %p152 = scmp.ne.s32.totalorder %s147, %s149
      %p153 = scmp.eq.s32.totalorder %s24, 0
      %p154 = por %p152, %p153
      %p155 = scmp.ne.s32.totalorder %s147, %s149
      %p156 = scmp.eq.s32.totalorder %s29, 1
      %p157 = por %p155, %p156
      %p158 = scmp.ne.s32.totalorder %s149, %s150
      %p159 = scmp.eq.s32.totalorder %s29, 0
      %p160 = por %p158, %p159
      %p161 = scmp.ne.s32.totalorder %s149, %s150
      %p162 = scmp.eq.s32.totalorder %s30, 1
      %p163 = por %p161, %p162
      %p165 = scmp.ne.s32.totalorder %s150, %s164
      %p166 = scmp.eq.s32.totalorder %s30, 0
      %p167 = por %p165, %p166
      %s169 = sadd.s32 %s168, 1
      %p172 = scmp.eq.s32.totalorder %s24, 1
      %p173 = scmp.ne.s32.totalorder %s168, %s170
      %p174 = scmp.eq.s32.totalorder %s24, 0
      %p175 = por %p173, %p174
      %p176 = scmp.ne.s32.totalorder %s168, %s170
      %p177 = scmp.eq.s32.totalorder %s29, 1
      %p178 = por %p176, %p177
      %p179 = scmp.ne.s32.totalorder %s170, %s171
      %p180 = scmp.eq.s32.totalorder %s29, 0
      %p181 = por %p179, %p180
      %p182 = scmp.ne.s32.totalorder %s170, %s171
      %p183 = scmp.eq.s32.totalorder %s30, 1
      %p184 = por %p182, %p183
      %p186 = scmp.ne.s32.totalorder %s171, %s185
      %p187 = scmp.eq.s32.totalorder %s30, 0
      %p188 = por %p186, %p187
      %s190 = sadd.s32 %s189, 1
      %p193 = scmp.eq.s32.totalorder %s24, 1
      %p194 = scmp.ne.s32.totalorder %s189, %s191
      %p195 = scmp.eq.s32.totalorder %s24, 0
      %p196 = por %p194, %p195
      %p197 = scmp.ne.s32.totalorder %s189, %s191
      %p198 = scmp.eq.s32.totalorder %s29, 1
      %p199 = por %p197, %p198
      %p200 = scmp.ne.s32.totalorder %s191, %s192
      %p201 = scmp.eq.s32.totalorder %s29, 0
      %p202 = por %p200, %p201
      %p203 = scmp.ne.s32.totalorder %s191, %s192
      %p204 = scmp.eq.s32.totalorder %s30, 1
      %p205 = por %p203, %p204
      %p207 = scmp.ne.s32.totalorder %s192, %s206
      %p208 = scmp.eq.s32.totalorder %s30, 0
      %p209 = por %p207, %p208
      %s211 = sadd.s32 %s210, 1
      %p214 = scmp.eq.s32.totalorder %s24, 1
      %p215 = scmp.ne.s32.totalorder %s210, %s212
      %p216 = scmp.eq.s32.totalorder %s24, 0
      %p217 = por %p215, %p216
      %p218 = scmp.ne.s32.totalorder %s210, %s212
      %p219 = scmp.eq.s32.totalorder %s29, 1
      %p220 = por %p218, %p219
      %p221 = scmp.ne.s32.totalorder %s212, %s213
      %p222 = scmp.eq.s32.totalorder %s29, 0
      %p223 = por %p221, %p222
      %p224 = scmp.ne.s32.totalorder %s212, %s213
      %p225 = scmp.eq.s32.totalorder %s30, 1
      %p226 = por %p224, %p225
      %p228 = scmp.ne.s32.totalorder %s213, %s227
      %p229 = scmp.eq.s32.totalorder %s30, 0
      %p230 = por %p228, %p229
      %s232 = sadd.s32 %s231, 1
      %p235 = scmp.eq.s32.totalorder %s24, 1
      %p236 = scmp.ne.s32.totalorder %s231, %s233
      %p237 = scmp.eq.s32.totalorder %s24, 0
      %p238 = por %p236, %p237
      %p239 = scmp.ne.s32.totalorder %s231, %s233
      %p240 = scmp.eq.s32.totalorder %s29, 1
      %p241 = por %p239, %p240
      %p242 = scmp.ne.s32.totalorder %s233, %s234
      %p243 = scmp.eq.s32.totalorder %s29, 0
      %p244 = por %p242, %p243
      %p245 = scmp.ne.s32.totalorder %s233, %s234
      %p246 = scmp.eq.s32.totalorder %s30, 1
      %p247 = por %p245, %p246
      %p249 = scmp.ne.s32.totalorder %s234, %s248
      %p250 = scmp.eq.s32.totalorder %s30, 0
      %p251 = por %p249, %p250
      %s252 = ssub.s32 %s24, %s31
      %p253 = scmp.eq.s32.totalorder %s252, 0
      %s255 = sadd.s32 %s254, 1
      %s256 = scalar_select %p253, %s254, %s255
      %p259 = pneg %p253
      %p260 = scmp.eq.s32.totalorder %s24, 1
      %p261 = por %p259, %p260
      %p262 = scmp.ne.s32.totalorder %s254, %s257
      %p263 = scmp.eq.s32.totalorder %s24, 0
      %p264 = por %p262, %p263
      %p265 = scmp.ne.s32.totalorder %s254, %s257
      %p266 = scmp.eq.s32.totalorder %s29, 1
      %p267 = por %p265, %p266
      %p268 = scmp.ne.s32.totalorder %s257, %s258
      %p269 = scmp.eq.s32.totalorder %s29, 0
      %p270 = por %p268, %p269
      %p271 = scmp.ne.s32.totalorder %s257, %s258
      %p272 = scmp.eq.s32.totalorder %s30, 1
      %p273 = por %p271, %p272
      %p275 = scmp.ne.s32.totalorder %s258, %s274
      %p276 = scmp.eq.s32.totalorder %s30, 0
      %p277 = por %p275, %p276
      %p278 = scmp.le.s32.totalorder 1, %s24
      %p279 = scmp.lt.s32.totalorder %s24, 3
      %p280 = pnand %p278, %p279
      %p281 = pneg %p280
      // Predicated region
      $region9: #{tpu_custom_call.1} parent=5 // pred_check
        _
      $region10: #{tpu_custom_call.1} parent=5 // pred_check_branch
        %283 = sbr.rel (%p280) target = $region12
      $region11: #{tpu_custom_call.1} parent=5 // pred_region
        %s284 = ssub.s32 %s24, 1
        // Predicated region
        $region13: #{tpu_custom_call.1} parent=11 // pred_check
          %p285 = pneg %p97
        $region14: #{tpu_custom_call.1} parent=11 // pred_check_branch
          %287 = sbr.rel (%p285) target = $region16
        $region15: #{tpu_custom_call.1} parent=11 // pred_region
          _
        $region16: #{tpu_custom_call.1} parent=11 // pred_fallthru
          _
        // Predicated region
        $region17: #{tpu_custom_call.1} parent=11 // pred_check
          %p288 = pneg %p118
        $region18: #{tpu_custom_call.1} parent=11 // pred_check_branch
          %290 = sbr.rel (%p288) target = $region20
        $region19: #{tpu_custom_call.1} parent=11 // pred_region
          _
        $region20: #{tpu_custom_call.1} parent=11 // pred_fallthru
          _
        // Predicated region
        $region21: #{tpu_custom_call.1} parent=11 // pred_check
          %p291 = pneg %p139
        $region22: #{tpu_custom_call.1} parent=11 // pred_check_branch
          %293 = sbr.rel (%p291) target = $region24
        $region23: #{tpu_custom_call.1} parent=11 // pred_region
          %s295 = ssub.s32 256, 256
          %296 = vsyncadd [#allocation7], %s295
          %s297 = sshll.u32 [#allocation6], 4
          %s298 = int_to_ptr.vmem [resolvable:$true] %s297
          %303 = dma.hbm_to_vmem [thread:$0]  %s4, 256, %s298, [#allocation7], 128, 128, 8
        $region24: #{tpu_custom_call.1} parent=11 // pred_fallthru
          _
        // Predicated region
        $region25: #{tpu_custom_call.1} parent=11 // pred_check
          %p304 = pneg %p160
        $region26: #{tpu_custom_call.1} parent=11 // pred_check_branch
          %306 = sbr.rel (%p304) target = $region28
        $region27: #{tpu_custom_call.1} parent=11 // pred_region
          _
        $region28: #{tpu_custom_call.1} parent=11 // pred_fallthru
          _
        // Predicated region
        $region29: #{tpu_custom_call.1} parent=11 // pred_check
          %p307 = pneg %p181
        $region30: #{tpu_custom_call.1} parent=11 // pred_check_branch
          %309 = sbr.rel (%p307) target = $region32
        $region31: #{tpu_custom_call.1} parent=11 // pred_region
          %s311 = ssub.s32 256, 256
          %312 = vsyncadd [#allocation7], %s311
          %s313 = sshll.u32 [#allocation8], 4
          %s314 = int_to_ptr.vmem [resolvable:$true] %s313
          %319 = dma.hbm_to_vmem [thread:$0]  %s6, 256, %s314, [#allocation7], 128, 128, 8
        $region32: #{tpu_custom_call.1} parent=11 // pred_fallthru
          _
        // Predicated region
        $region33: #{tpu_custom_call.1} parent=11 // pred_check
          %p320 = pneg %p202
        $region34: #{tpu_custom_call.1} parent=11 // pred_check_branch
          %322 = sbr.rel (%p320) target = $region36
        $region35: #{tpu_custom_call.1} parent=11 // pred_region
          _
        $region36: #{tpu_custom_call.1} parent=11 // pred_fallthru
          _
        // Predicated region
        $region37: #{tpu_custom_call.1} parent=11 // pred_check
          %p323 = pneg %p223
        $region38: #{tpu_custom_call.1} parent=11 // pred_check_branch
          %325 = sbr.rel (%p323) target = $region40
        $region39: #{tpu_custom_call.1} parent=11 // pred_region
          _
        $region40: #{tpu_custom_call.1} parent=11 // pred_fallthru
          _
        // Predicated region
        $region41: #{tpu_custom_call.1} parent=11 // pred_check
          %p326 = pneg %p244
        $region42: #{tpu_custom_call.1} parent=11 // pred_check_branch
          %328 = sbr.rel (%p326) target = $region44
        $region43: #{tpu_custom_call.1} parent=11 // pred_region
          _
        $region44: #{tpu_custom_call.1} parent=11 // pred_fallthru
          _
      $region12: #{tpu_custom_call.1} parent=5 // pred_fallthru
        _
      %p329 = scmp.lt.s32.totalorder %s24, 2
      // Predicated region
      $region45: #{tpu_custom_call.1} parent=5 // pred_check
        %p330 = pneg %p329
      $region46: #{tpu_custom_call.1} parent=5 // pred_check_branch
        %332 = sbr.rel (%p330) target = $region48
      $region47: #{tpu_custom_call.1} parent=5 // pred_region
        // Predicated region
        $region49: #{tpu_custom_call.1} parent=47 // pred_check
          %p333 = pneg %p44
        $region50: #{tpu_custom_call.1} parent=47 // pred_check_branch
          %335 = sbr.rel (%p333) target = $region52
        $region51: #{tpu_custom_call.1} parent=47 // pred_region
          %s336 = smul.u32 2, %s24
          %p337 = scmp.lt.s32.totalorder %s336, 3
          %s338 = scalar_select %p337, %s336, 3
          %s339 = smul.addr %s338, 8
          %s340 = scalar_lea.vmem %s0, %s339
          %s341 = smul.u32 2, %s24
        $region52: #{tpu_custom_call.1} parent=47 // pred_fallthru
          _
        // Predicated region
        $region53: #{tpu_custom_call.1} parent=47 // pred_check
          %p342 = pneg %p70
        $region54: #{tpu_custom_call.1} parent=47 // pred_check_branch
          %344 = sbr.rel (%p342) target = $region56
        $region55: #{tpu_custom_call.1} parent=47 // pred_region
          %s345 = sand.u32 %s60, 1
          %s346 = scalar_lea.sflag [#allocation4], %s345
          %s347 = sand.u32 %s60, 1
          %s348 = smul.addr %s347, 16
          %s349 = scalar_lea.vmem [#allocation3], %s348
          %s350 = smul.u32 2, %s24
          %s352 = ssub.s32 256, 256
          %353 = vsyncadd %s346, %s352
          %s354 = smul.addr %s350, 128
          %s355 = scalar_lea.hbm %s1, %s354
          %s356 = sshll.u32 %s349, 4
          %s357 = int_to_ptr.vmem [resolvable:$true] %s356
          %362 = dma.hbm_to_vmem [thread:$0]  %s355, 256, %s357, %s346, 128, 128, 8
        $region56: #{tpu_custom_call.1} parent=47 // pred_fallthru
          _
      $region48: #{tpu_custom_call.1} parent=5 // pred_fallthru
        _
      %p363 = scmp.le.s32.totalorder 1, %s24
      %p364 = scmp.lt.s32.totalorder %s24, 3
      %p365 = pnand %p363, %p364
      %p366 = pneg %p365
      // Predicated region
      $region57: #{tpu_custom_call.1} parent=5 // pred_check
        _
      $region58: #{tpu_custom_call.1} parent=5 // pred_check_branch
        %368 = sbr.rel (%p365) target = $region60
      $region59: #{tpu_custom_call.1} parent=5 // pred_region
        %s369 = ssub.s32 %s24, 1
        %s370 = sand.u32 %s63, 1
        %s371 = scalar_lea.sflag [#allocation4], %s370
        %s372 = sand.u32 %s63, 1
        %s373 = smul.addr %s372, 16
        %s374 = scalar_lea.vmem [#allocation3], %s373
        // Predicated region
        $region61: #{tpu_custom_call.1} parent=59 // pred_check
          %p375 = pneg %p76
        $region62: #{tpu_custom_call.1} parent=59 // pred_check_branch
          %377 = sbr.rel (%p375) target = $region64
        $region63: #{tpu_custom_call.1} parent=59 // pred_region
          %378 = dma.done %s371, 256
        $region64: #{tpu_custom_call.1} parent=59 // pred_fallthru
          _
        // Predicated region
        $region65: #{tpu_custom_call.1} parent=59 // pred_check
          %p379 = pneg %p139
        $region66: #{tpu_custom_call.1} parent=59 // pred_check_branch
          %381 = sbr.rel (%p379) target = $region68
        $region67: #{tpu_custom_call.1} parent=59 // pred_region
          %382 = dma.done [#allocation7], 256
        $region68: #{tpu_custom_call.1} parent=59 // pred_fallthru
          _
        // Predicated region
        $region69: #{tpu_custom_call.1} parent=59 // pred_check
          %p383 = pneg %p181
        $region70: #{tpu_custom_call.1} parent=59 // pred_check_branch
          %385 = sbr.rel (%p383) target = $region72
        $region71: #{tpu_custom_call.1} parent=59 // pred_region
          %386 = dma.done [#allocation7], 256
        $region72: #{tpu_custom_call.1} parent=59 // pred_fallthru
          _
        %s387 = smul.u32 2, %s29
        %p388 = scmp.lt.s32.totalorder %s387, 3
        %s389 = scalar_select %p388, %s387, 3
        %s390 = smul.addr %s389, 8
        %s391 = scalar_lea.vmem %s0, %s390
        %p392 = pneg %p50
        %p393 = pneg %p47
        %s394 = sand.u32 %s63, 1
        %s395 = scalar_lea.sflag [#allocation4], %s394
        %s396 = sand.u32 %s63, 1
        %s397 = smul.addr %s396, 16
        %s398 = scalar_lea.vmem [#allocation3], %s397
        %p399 = pneg %p76
        %p400 = pneg %p73
        %p401 = pneg %p97
        %p402 = pneg %p94
        %p403 = pneg %p118
        %p404 = pneg %p115
        %p405 = pneg %p139
        %p406 = pneg %p136
        %p407 = pneg %p160
        %p408 = pneg %p157
        %p409 = pneg %p181
        %p410 = pneg %p178
        %p411 = pneg %p202
        %p412 = pneg %p199
        %p413 = pneg %p223
        %p414 = pneg %p220
        %p415 = pneg %p244
        %p416 = pneg %p241
        %p417 = pneg %p270
        %p418 = pneg %p267
        %s419 = sand.u32 %s257, 1
        %s420 = scalar_lea.sflag [#allocation5], %s419
        %s421 = sand.u32 %s257, 1
        %s422 = smul.addr %s421, 16
        %s423 = scalar_lea.vmem [#allocation9], %s422
        %s424 = smul.u32 2, %s29
        %p425 = scmp.lt.s32.totalorder %s424, 3
        %s426 = scalar_select %p425, %s424, 3
        %s427 = smul.addr %s426, 8
        %s428 = scalar_lea.vmem %s0, %s427
        %s429 = smul.u32 2, %s29
        %s430 = smul.u32 2, %s29
        %s431 = smul.u32 2, %s29
        %v432 = vld [vmem:[%s428] sm:$0xff]
        %v433 = vld [vmem:[%s428 + $0x8] sm:$0xff]
        %v434 = vld [vmem:[%s374] sm:$0xff]
        %v435 = vld [vmem:[%s374 + $0x8] sm:$0xff]
        %v436 = vld [vmem:[%s2] sm:$0xff]
        %v437 = vld [vmem:[%s2 + $0x8] sm:$0xff]
        %v438 = vld [vmem:[%s3] sm:$0xff]
        %v439 = vld [vmem:[%s3 + $0x8] sm:$0xff]
        %441 = vset.pattern.permute.xlu0 0
        %442 = vperm.xlu0 %441, %v438
        %v443 = vpop.permute.xlu0 %442
        %446 = vset.pattern.permute.xlu0 0
        %447 = vperm.xlu0 %446, %v439
        %v448 = vpop.permute.xlu0 %447
        %vm450 = vcmask 130048
        %v452 = vsel %vm450, %v436, 0
        %v455 = vsel %vm450, %v437, 0
        %457 = vmatprep.subr.mxu0 0.0
        %458 = vmatpush1.msra.mxu0 0.0
        %459 = vmatprep.subr.mxu0 0.0
        %460 = vmatpush1.msra.mxu0 0.0
        %461 = vmatprep.subr.mxu0 0.0
        %462 = vmatpush1.msra.mxu0 0.0
        %463 = vmatprep.subr.mxu0 0.0
        %464 = vmatpush1.msra.mxu0 0.0
        %465 = vmatprep.subr.mxu0 0.0
        %466 = vmatpush1.msra.mxu0 0.0
        %467 = vmatprep.subr.mxu0 0.0
        %468 = vmatpush1.msra.mxu0 0.0
        %469 = vmatprep.subr.mxu0 0.0
        %470 = vmatpush1.msra.mxu0 0.0
        %471 = vmatprep.subr.mxu0 0.0
        %472 = vmatpush1.msra.mxu0 0.0
        %473 = vmatprep.subr.mxu0 0.0
        %474 = vmatpush1.msra.mxu0 0.0
        %475 = vmatprep.subr.mxu0 0.0
        %476 = vmatpush1.msra.mxu0 0.0
        %477 = vmatprep.subr.mxu0 0.0
        %478 = vmatpush1.msra.mxu0 0.0
        %479 = vmatprep.subr.mxu0 0.0
        %480 = vmatpush1.msra.mxu0 0.0
        %481 = vmatprep.subr.mxu0 0.0
        %482 = vmatpush1.msra.mxu0 0.0
        %483 = vmatprep.subr.mxu0 0.0
        %484 = vmatpush1.msra.mxu0 0.0
        %485 = vmatprep.subr.mxu0 0.0
        %486 = vmatpush1.msra.mxu0 %v433
        %487 = vmatprep.subr.mxu0 0.0
        %488 = vmatpush1.msra.mxu0 %v432
        %489 = vmatprep.subr.mxu0 0.0
        %490 = vmatpush2.msra.mxu0 0.0
        %491 = vmatprep.subr.mxu0 0.0
        %492 = vmatpush2.msra.mxu0 0.0
        %493 = vmatprep.subr.mxu0 0.0
        %494 = vmatpush2.msra.mxu0 0.0
        %495 = vmatprep.subr.mxu0 0.0
        %496 = vmatpush2.msra.mxu0 0.0
        %497 = vmatprep.subr.mxu0 0.0
        %498 = vmatpush2.msra.mxu0 0.0
        %499 = vmatprep.subr.mxu0 0.0
        %500 = vmatpush2.msra.mxu0 0.0
        %501 = vmatprep.subr.mxu0 0.0
        %502 = vmatpush2.msra.mxu0 0.0
        %503 = vmatprep.subr.mxu0 0.0
        %504 = vmatpush2.msra.mxu0 0.0
        %505 = vmatprep.subr.mxu0 0.0
        %506 = vmatpush2.msra.mxu0 0.0
        %507 = vmatprep.subr.mxu0 0.0
        %508 = vmatpush2.msra.mxu0 0.0
        %509 = vmatprep.subr.mxu0 0.0
        %510 = vmatpush2.msra.mxu0 0.0
        %511 = vmatprep.subr.mxu0 0.0
        %512 = vmatpush2.msra.mxu0 0.0
        %513 = vmatprep.subr.mxu0 0.0
        %514 = vmatpush2.msra.mxu0 0.0
        %515 = vmatprep.subr.mxu0 0.0
        %516 = vmatpush2.msra.mxu0 0.0
        %517 = vmatprep.subr.mxu0 0.0
        %518 = vmatpush2.msra.mxu0 0.0
        %519 = vmatprep.subr.mxu0 0.0
        %520 = vmatpush2.msra.mxu0 0.0
        %521 = vmatprep.mubr.f32.mxu0 0.0
        %522 = vmatmul.mubr.f32.gmra.mxu0 %v452
        %v523 = vpop.f32.mrf.mxu0
        %v524 = vadd.f32 %v443, %v523
        %v525 = vpop.f32.mrf.mxu0
        %526 = vmatprep.mubr.f32.mxu0 0.0
        %527 = vmatmul.mubr.f32.gmra.mxu0 %v455
        %v528 = vpop.f32.mrf.mxu0
        %v529 = vadd.f32 %v448, %v528
        %v530 = vpop.f32.mrf.mxu0
        %531 = vdwg.mxu0
        %v532 = vld [vmem:[#allocation6] sm:$0xff]
        %v533 = vld [vmem:[#allocation6 + $0x8] sm:$0xff]
        %v534 = vld [vmem:[%s5] sm:$0xff]
        %v535 = vld [vmem:[%s5 + $0x8] sm:$0xff]
        %537 = vset.pattern.permute.xlu0 0
        %538 = vperm.xlu0 %537, %v534
        %v539 = vpop.permute.xlu0 %538
        %542 = vset.pattern.permute.xlu0 0
        %543 = vperm.xlu0 %542, %v535
        %v544 = vpop.permute.xlu0 %543
        %v547 = vsel %vm450, %v532, 0
        %v550 = vsel %vm450, %v533, 0
        %552 = vmatprep.subr.mxu0 0.0
        %553 = vmatpush1.msra.mxu0 0.0
        %554 = vmatprep.subr.mxu0 0.0
        %555 = vmatpush1.msra.mxu0 0.0
        %556 = vmatprep.subr.mxu0 0.0
        %557 = vmatpush1.msra.mxu0 0.0
        %558 = vmatprep.subr.mxu0 0.0
        %559 = vmatpush1.msra.mxu0 0.0
        %560 = vmatprep.subr.mxu0 0.0
        %561 = vmatpush1.msra.mxu0 0.0
        %562 = vmatprep.subr.mxu0 0.0
        %563 = vmatpush1.msra.mxu0 0.0
        %564 = vmatprep.subr.mxu0 0.0
        %565 = vmatpush1.msra.mxu0 0.0
        %566 = vmatprep.subr.mxu0 0.0
        %567 = vmatpush1.msra.mxu0 0.0
        %568 = vmatprep.subr.mxu0 0.0
        %569 = vmatpush1.msra.mxu0 0.0
        %570 = vmatprep.subr.mxu0 0.0
        %571 = vmatpush1.msra.mxu0 0.0
        %572 = vmatprep.subr.mxu0 0.0
        %573 = vmatpush1.msra.mxu0 0.0
        %574 = vmatprep.subr.mxu0 0.0
        %575 = vmatpush1.msra.mxu0 0.0
        %576 = vmatprep.subr.mxu0 0.0
        %577 = vmatpush1.msra.mxu0 0.0
        %578 = vmatprep.subr.mxu0 0.0
        %579 = vmatpush1.msra.mxu0 0.0
        %580 = vmatprep.subr.mxu0 0.0
        %581 = vmatpush1.msra.mxu0 %v435
        %582 = vmatprep.subr.mxu0 0.0
        %583 = vmatpush1.msra.mxu0 %v434
        %584 = vmatprep.subr.mxu0 0.0
        %585 = vmatpush2.msra.mxu0 0.0
        %586 = vmatprep.subr.mxu0 0.0
        %587 = vmatpush2.msra.mxu0 0.0
        %588 = vmatprep.subr.mxu0 0.0
        %589 = vmatpush2.msra.mxu0 0.0
        %590 = vmatprep.subr.mxu0 0.0
        %591 = vmatpush2.msra.mxu0 0.0
        %592 = vmatprep.subr.mxu0 0.0
        %593 = vmatpush2.msra.mxu0 0.0
        %594 = vmatprep.subr.mxu0 0.0
        %595 = vmatpush2.msra.mxu0 0.0
        %596 = vmatprep.subr.mxu0 0.0
        %597 = vmatpush2.msra.mxu0 0.0
        %598 = vmatprep.subr.mxu0 0.0
        %599 = vmatpush2.msra.mxu0 0.0
        %600 = vmatprep.subr.mxu0 0.0
        %601 = vmatpush2.msra.mxu0 0.0
        %602 = vmatprep.subr.mxu0 0.0
        %603 = vmatpush2.msra.mxu0 0.0
        %604 = vmatprep.subr.mxu0 0.0
        %605 = vmatpush2.msra.mxu0 0.0
        %606 = vmatprep.subr.mxu0 0.0
        %607 = vmatpush2.msra.mxu0 0.0
        %608 = vmatprep.subr.mxu0 0.0
        %609 = vmatpush2.msra.mxu0 0.0
        %610 = vmatprep.subr.mxu0 0.0
        %611 = vmatpush2.msra.mxu0 0.0
        %612 = vmatprep.subr.mxu0 0.0
        %613 = vmatpush2.msra.mxu0 0.0
        %614 = vmatprep.subr.mxu0 0.0
        %615 = vmatpush2.msra.mxu0 0.0
        %616 = vmatprep.mubr.f32.mxu0 0.0
        %617 = vmatmul.mubr.f32.gmra.mxu0 %v547
        %v618 = vpop.f32.mrf.mxu0
        %v619 = vadd.f32 %v539, %v618
        %v620 = vpop.f32.mrf.mxu0
        %621 = vmatprep.mubr.f32.mxu0 0.0
        %622 = vmatmul.mubr.f32.gmra.mxu0 %v550
        %v623 = vpop.f32.mrf.mxu0
        %v624 = vadd.f32 %v544, %v623
        %v625 = vpop.f32.mrf.mxu0
        %626 = vdwg.mxu0
        %v627 = vld [vmem:[#allocation8] sm:$0xff]
        %v628 = vld [vmem:[#allocation8 + $0x8] sm:$0xff]
        %v629 = vld [vmem:[%s7] sm:$0xff]
        %v630 = vld [vmem:[%s7 + $0x8] sm:$0xff]
        %632 = vset.pattern.permute.xlu0 0
        %633 = vperm.xlu0 %632, %v629
        %v634 = vpop.permute.xlu0 %633
        %637 = vset.pattern.permute.xlu0 0
        %638 = vperm.xlu0 %637, %v630
        %v639 = vpop.permute.xlu0 %638
        %v642 = vsel %vm450, %v627, 0
        %v645 = vsel %vm450, %v628, 0
        %647 = vmatprep.subr.mxu0 0.0
        %648 = vmatpush1.msra.mxu0 0.0
        %649 = vmatprep.subr.mxu0 0.0
        %650 = vmatpush1.msra.mxu0 0.0
        %651 = vmatprep.subr.mxu0 0.0
        %652 = vmatpush1.msra.mxu0 0.0
        %653 = vmatprep.subr.mxu0 0.0
        %654 = vmatpush1.msra.mxu0 0.0
        %655 = vmatprep.subr.mxu0 0.0
        %656 = vmatpush1.msra.mxu0 0.0
        %657 = vmatprep.subr.mxu0 0.0
        %658 = vmatpush1.msra.mxu0 0.0
        %659 = vmatprep.subr.mxu0 0.0
        %660 = vmatpush1.msra.mxu0 0.0
        %661 = vmatprep.subr.mxu0 0.0
        %662 = vmatpush1.msra.mxu0 0.0
        %663 = vmatprep.subr.mxu0 0.0
        %664 = vmatpush1.msra.mxu0 0.0
        %665 = vmatprep.subr.mxu0 0.0
        %666 = vmatpush1.msra.mxu0 0.0
        %667 = vmatprep.subr.mxu0 0.0
        %668 = vmatpush1.msra.mxu0 0.0
        %669 = vmatprep.subr.mxu0 0.0
        %670 = vmatpush1.msra.mxu0 0.0
        %671 = vmatprep.subr.mxu0 0.0
        %672 = vmatpush1.msra.mxu0 0.0
        %673 = vmatprep.subr.mxu0 0.0
        %674 = vmatpush1.msra.mxu0 0.0
        %675 = vmatprep.subr.mxu0 0.0
        %676 = vmatpush1.msra.mxu0 %v435
        %677 = vmatprep.subr.mxu0 0.0
        %678 = vmatpush1.msra.mxu0 %v434
        %679 = vmatprep.subr.mxu0 0.0
        %680 = vmatpush2.msra.mxu0 0.0
        %681 = vmatprep.subr.mxu0 0.0
        %682 = vmatpush2.msra.mxu0 0.0
        %683 = vmatprep.subr.mxu0 0.0
        %684 = vmatpush2.msra.mxu0 0.0
        %685 = vmatprep.subr.mxu0 0.0
        %686 = vmatpush2.msra.mxu0 0.0
        %687 = vmatprep.subr.mxu0 0.0
        %688 = vmatpush2.msra.mxu0 0.0
        %689 = vmatprep.subr.mxu0 0.0
        %690 = vmatpush2.msra.mxu0 0.0
        %691 = vmatprep.subr.mxu0 0.0
        %692 = vmatpush2.msra.mxu0 0.0
        %693 = vmatprep.subr.mxu0 0.0
        %694 = vmatpush2.msra.mxu0 0.0
        %695 = vmatprep.subr.mxu0 0.0
        %696 = vmatpush2.msra.mxu0 0.0
        %697 = vmatprep.subr.mxu0 0.0
        %698 = vmatpush2.msra.mxu0 0.0
        %699 = vmatprep.subr.mxu0 0.0
        %700 = vmatpush2.msra.mxu0 0.0
        %701 = vmatprep.subr.mxu0 0.0
        %702 = vmatpush2.msra.mxu0 0.0
        %703 = vmatprep.subr.mxu0 0.0
        %704 = vmatpush2.msra.mxu0 0.0
        %705 = vmatprep.subr.mxu0 0.0
        %706 = vmatpush2.msra.mxu0 0.0
        %707 = vmatprep.subr.mxu0 0.0
        %708 = vmatpush2.msra.mxu0 0.0
        %709 = vmatprep.subr.mxu0 0.0
        %710 = vmatpush2.msra.mxu0 0.0
        %711 = vmatprep.mubr.f32.mxu0 0.0
        %712 = vmatmul.mubr.f32.gmra.mxu0 %v642
        %v713 = vpop.f32.mrf.mxu0
        %v714 = vadd.f32 %v634, %v713
        %v715 = vpop.f32.mrf.mxu0
        %716 = vmatprep.mubr.f32.mxu0 0.0
        %717 = vmatmul.mubr.f32.gmra.mxu0 %v645
        %v718 = vpop.f32.mrf.mxu0
        %v719 = vadd.f32 %v639, %v718
        %v720 = vpop.f32.mrf.mxu0
        %721 = vdwg.mxu0
        %vm722 = vcmask 523264
        %v724 = vsel %vm722, %v524, 0
        %v727 = vsel %vm722, %v529, 0
        %v730 = vsel %vm722, %v619, 0
        %v733 = vsel %vm722, %v624, 0
        %735 = vmatprep.subr.mxu0 0.0
        %736 = vmatpush1.xpose.msra.mxu0 0.0
        %737 = vmatprep.subr.mxu0 0.0
        %738 = vmatpush1.xpose.msra.mxu0 0.0
        %739 = vmatprep.subr.mxu0 0.0
        %740 = vmatpush1.xpose.msra.mxu0 0.0
        %741 = vmatprep.subr.mxu0 0.0
        %742 = vmatpush1.xpose.msra.mxu0 0.0
        %743 = vmatprep.subr.mxu0 0.0
        %744 = vmatpush1.xpose.msra.mxu0 0.0
        %745 = vmatprep.subr.mxu0 0.0
        %746 = vmatpush1.xpose.msra.mxu0 0.0
        %747 = vmatprep.subr.mxu0 0.0
        %748 = vmatpush1.xpose.msra.mxu0 0.0
        %749 = vmatprep.subr.mxu0 0.0
        %750 = vmatpush1.xpose.msra.mxu0 0.0
        %751 = vmatprep.subr.mxu0 0.0
        %752 = vmatpush1.xpose.msra.mxu0 0.0
        %753 = vmatprep.subr.mxu0 0.0
        %754 = vmatpush1.xpose.msra.mxu0 0.0
        %755 = vmatprep.subr.mxu0 0.0
        %756 = vmatpush1.xpose.msra.mxu0 0.0
        %757 = vmatprep.subr.mxu0 0.0
        %758 = vmatpush1.xpose.msra.mxu0 0.0
        %759 = vmatprep.subr.mxu0 0.0
        %760 = vmatpush1.xpose.msra.mxu0 0.0
        %761 = vmatprep.subr.mxu0 0.0
        %762 = vmatpush1.xpose.msra.mxu0 0.0
        %763 = vmatprep.subr.mxu0 0.0
        %764 = vmatpush1.xpose.msra.mxu0 %v733
        %765 = vmatprep.subr.mxu0 0.0
        %766 = vmatpush1.xpose.msra.mxu0 %v730
        %767 = vmatprep.subr.mxu0 0.0
        %768 = vmatpush2.xpose.msra.mxu0 0.0
        %769 = vmatprep.subr.mxu0 0.0
        %770 = vmatpush2.xpose.msra.mxu0 0.0
        %771 = vmatprep.subr.mxu0 0.0
        %772 = vmatpush2.xpose.msra.mxu0 0.0
        %773 = vmatprep.subr.mxu0 0.0
        %774 = vmatpush2.xpose.msra.mxu0 0.0
        %775 = vmatprep.subr.mxu0 0.0
        %776 = vmatpush2.xpose.msra.mxu0 0.0
        %777 = vmatprep.subr.mxu0 0.0
        %778 = vmatpush2.xpose.msra.mxu0 0.0
        %779 = vmatprep.subr.mxu0 0.0
        %780 = vmatpush2.xpose.msra.mxu0 0.0
        %781 = vmatprep.subr.mxu0 0.0
        %782 = vmatpush2.xpose.msra.mxu0 0.0
        %783 = vmatprep.subr.mxu0 0.0
        %784 = vmatpush2.xpose.msra.mxu0 0.0
        %785 = vmatprep.subr.mxu0 0.0
        %786 = vmatpush2.xpose.msra.mxu0 0.0
        %787 = vmatprep.subr.mxu0 0.0
        %788 = vmatpush2.xpose.msra.mxu0 0.0
        %789 = vmatprep.subr.mxu0 0.0
        %790 = vmatpush2.xpose.msra.mxu0 0.0
        %791 = vmatprep.subr.mxu0 0.0
        %792 = vmatpush2.xpose.msra.mxu0 0.0
        %793 = vmatprep.subr.mxu0 0.0
        %794 = vmatpush2.xpose.msra.mxu0 0.0
        %795 = vmatprep.subr.mxu0 0.0
        %796 = vmatpush2.xpose.msra.mxu0 0.0
        %797 = vmatprep.subr.mxu0 0.0
        %798 = vmatpush2.xpose.msra.mxu0 0.0
        %799 = vmatprep.mubr.f32.mxu0 0.0
        %800 = vmatmul.mubr.f32.gmra.mxu0 %v724
        %v801 = vpop.f32.mrf.mxu0
        %v802 = vadd.f32 0.0, %v801
        %v803 = vpop.f32.mrf.mxu0
        %804 = vmatprep.mubr.f32.mxu0 0.0
        %805 = vmatmul.mubr.f32.gmra.mxu0 %v727
        %v806 = vpop.f32.mrf.mxu0
        %v807 = vadd.f32 0.0, %v806
        %v808 = vpop.f32.mrf.mxu0
        %809 = vdwg.mxu0
        %v810 = vld [vmem:[%s8] sm:$0xff]
        %v811 = vld [vmem:[%s8 + $0x8] sm:$0xff]
        %vm812 = vcmp.gt.f32.partialorder %v810, 0.5
        %vm813 = vcmp.gt.f32.partialorder %v811, 0.5
        %v814 = vsel %vm812, %v802, -1e+30
        %v815 = vsel %vm813, %v807, -1e+30
        %v816 = vsel %vm450, %v814, -inf
        %817 = vmax.xlane.f32.xlu0 %v816
        %v818 = vpop.xlane.xlu0 %817
        %v819 = vsel %vm450, %v815, -inf
        %820 = vmax.xlane.f32.xlu0 %v819
        %v821 = vpop.xlane.xlu0 %820
        %v822 = vsub.f32 %v814, %v818
        %v823 = vsub.f32 %v815, %v821
        %v824 = vmul.f32 %v822, 1.442695
        %v825 = vpow.pop %v824
        %v826 = vmul.f32 %v823, 1.442695
        %v827 = vpow.pop %v826
        %v828 = vsel %vm812, %v825, 0.0
        %v829 = vsel %vm813, %v827, 0.0
        %v830 = vsel %vm450, %v828, 0.0
        %831 = vadd.xlane.f32.xlu0 %v830
        %v832 = vpop.xlane.xlu0 %831
        %v833 = vsel %vm450, %v829, 0.0
        %834 = vadd.xlane.f32.xlu0 %v833
        %v835 = vpop.xlane.xlu0 %834
        %v836 = vrcp.pop %v832
        %v837 = vrcp.pop %v835
        %v838 = vmul.f32 %v828, %v836
        %v839 = vmul.f32 %v829, %v837
        %v841 = vsel %vm450, %v838, 0
        %v844 = vsel %vm450, %v839, 0
        %846 = vmatprep.subr.mxu0 0.0
        %847 = vmatpush1.msra.mxu0 0.0
        %848 = vmatprep.subr.mxu0 0.0
        %849 = vmatpush1.msra.mxu0 0.0
        %850 = vmatprep.subr.mxu0 0.0
        %851 = vmatpush1.msra.mxu0 0.0
        %852 = vmatprep.subr.mxu0 0.0
        %853 = vmatpush1.msra.mxu0 0.0
        %854 = vmatprep.subr.mxu0 0.0
        %855 = vmatpush1.msra.mxu0 0.0
        %856 = vmatprep.subr.mxu0 0.0
        %857 = vmatpush1.msra.mxu0 0.0
        %858 = vmatprep.subr.mxu0 0.0
        %859 = vmatpush1.msra.mxu0 0.0
        %860 = vmatprep.subr.mxu0 0.0
        %861 = vmatpush1.msra.mxu0 0.0
        %862 = vmatprep.subr.mxu0 0.0
        %863 = vmatpush1.msra.mxu0 0.0
        %864 = vmatprep.subr.mxu0 0.0
        %865 = vmatpush1.msra.mxu0 0.0
        %866 = vmatprep.subr.mxu0 0.0
        %867 = vmatpush1.msra.mxu0 0.0
        %868 = vmatprep.subr.mxu0 0.0
        %869 = vmatpush1.msra.mxu0 0.0
        %870 = vmatprep.subr.mxu0 0.0
        %871 = vmatpush1.msra.mxu0 0.0
        %872 = vmatprep.subr.mxu0 0.0
        %873 = vmatpush1.msra.mxu0 0.0
        %874 = vmatprep.subr.mxu0 0.0
        %875 = vmatpush1.msra.mxu0 %v719
        %876 = vmatprep.subr.mxu0 0.0
        %877 = vmatpush1.msra.mxu0 %v714
        %878 = vmatprep.subr.mxu0 0.0
        %879 = vmatpush2.msra.mxu0 0.0
        %880 = vmatprep.subr.mxu0 0.0
        %881 = vmatpush2.msra.mxu0 0.0
        %882 = vmatprep.subr.mxu0 0.0
        %883 = vmatpush2.msra.mxu0 0.0
        %884 = vmatprep.subr.mxu0 0.0
        %885 = vmatpush2.msra.mxu0 0.0
        %886 = vmatprep.subr.mxu0 0.0
        %887 = vmatpush2.msra.mxu0 0.0
        %888 = vmatprep.subr.mxu0 0.0
        %889 = vmatpush2.msra.mxu0 0.0
        %890 = vmatprep.subr.mxu0 0.0
        %891 = vmatpush2.msra.mxu0 0.0
        %892 = vmatprep.subr.mxu0 0.0
        %893 = vmatpush2.msra.mxu0 0.0
        %894 = vmatprep.subr.mxu0 0.0
        %895 = vmatpush2.msra.mxu0 0.0
        %896 = vmatprep.subr.mxu0 0.0
        %897 = vmatpush2.msra.mxu0 0.0
        %898 = vmatprep.subr.mxu0 0.0
        %899 = vmatpush2.msra.mxu0 0.0
        %900 = vmatprep.subr.mxu0 0.0
        %901 = vmatpush2.msra.mxu0 0.0
        %902 = vmatprep.subr.mxu0 0.0
        %903 = vmatpush2.msra.mxu0 0.0
        %904 = vmatprep.subr.mxu0 0.0
        %905 = vmatpush2.msra.mxu0 0.0
        %906 = vmatprep.subr.mxu0 0.0
        %907 = vmatpush2.msra.mxu0 0.0
        %908 = vmatprep.subr.mxu0 0.0
        %909 = vmatpush2.msra.mxu0 0.0
        %910 = vmatprep.mubr.f32.mxu0 0.0
        %911 = vmatmul.mubr.f32.gmra.mxu0 %v841
        %v912 = vpop.f32.mrf.mxu0
        %v913 = vadd.f32 0.0, %v912
        %v914 = vpop.f32.mrf.mxu0
        %915 = vmatprep.mubr.f32.mxu0 0.0
        %916 = vmatmul.mubr.f32.gmra.mxu0 %v844
        %v917 = vpop.f32.mrf.mxu0
        %v918 = vadd.f32 0.0, %v917
        %v919 = vpop.f32.mrf.mxu0
        %920 = vdwg.mxu0
        %s921 = sld [smem:[#allocation2]]
        %v922 = vstv %s921
        %v923 = vmul.f32 %v922, %v913
        %v924 = vmul.f32 %v922, %v918
        %v925 = vadd.f32 %v923, %v432
        %v926 = vadd.f32 %v924, %v433
        %927 = vst.msk [vmem:[%s423] sm:$0xff] %vm722, %v925
        %928 = vst.msk [vmem:[%s423 + $0x8] sm:$0xff] %vm722, %v926
        %s929 = sand.u32 %s257, 1
        %s930 = scalar_lea.sflag [#allocation5], %s929
        %s931 = sand.u32 %s257, 1
        %s932 = smul.addr %s931, 16
        %s933 = scalar_lea.vmem [#allocation9], %s932
        // Predicated region
        $region73: #{tpu_custom_call.1} parent=59 // pred_check
          %p934 = pneg %p267
        $region74: #{tpu_custom_call.1} parent=59 // pred_check_branch
          %936 = sbr.rel (%p934) target = $region76
        $region75: #{tpu_custom_call.1} parent=59 // pred_region
          %s937 = smul.u32 2, %s29
          %s939 = ssub.s32 256, 256
          %940 = vsyncadd %s930, %s939
          %s941 = smul.addr %s937, 128
          %s942 = scalar_lea.hbm %s10, %s941
          %s943 = sshll.u32 %s933, 4
          %s944 = int_to_ptr.vmem [resolvable:$true] %s943
          %949 = dma.vmem_to_hbm [thread:$0]  %s944, 256, %s942, %s930, 128, 128, 8
        $region76: #{tpu_custom_call.1} parent=59 // pred_fallthru
          _
      $region60: #{tpu_custom_call.1} parent=5 // pred_fallthru
        _
      %p950 = scmp.le.s32.totalorder 2, %s24
      // Predicated region
      $region77: #{tpu_custom_call.1} parent=5 // pred_check
        %p951 = pneg %p950
      $region78: #{tpu_custom_call.1} parent=5 // pred_check_branch
        %953 = sbr.rel (%p951) target = $region80
      $region79: #{tpu_custom_call.1} parent=5 // pred_region
        %s954 = ssub.s32 %s24, 2
        // Predicated region
        $region81: #{tpu_custom_call.1} parent=79 // pred_check
          %p955 = pneg %p273
        $region82: #{tpu_custom_call.1} parent=79 // pred_check_branch
          %957 = sbr.rel (%p955) target = $region84
        $region83: #{tpu_custom_call.1} parent=79 // pred_region
          %s958 = sand.u32 %s258, 1
          %s959 = scalar_lea.sflag [#allocation5], %s958
          %s960 = sand.u32 %s258, 1
          %s961 = smul.addr %s960, 16
          %s962 = scalar_lea.vmem [#allocation9], %s961
          %963 = dma.done %s959, 256
        $region84: #{tpu_custom_call.1} parent=79 // pred_fallthru
          _
      $region80: #{tpu_custom_call.1} parent=5 // pred_fallthru
        _
    $region6: #{tpu_custom_call.1} parent=1 // loop_footer
      %s28 = sadd.s32 1, %s24
    $region7: #{tpu_custom_call.1} parent=1 // loop_footer_branch
      %23 = sbr.rel target = $region3
    $region8: #{tpu_custom_call.1} parent=1 // loop_exit
      _
    %964 = vsyncpa [#allocation4], 1
    %s965 = scalar_lea.sflag [#allocation4], 1
    %966 = vsyncpa %s965, 1
    %967 = vsyncpa [#allocation7], 1
    %968 = vsyncpa [#allocation5], 1
    %s969 = scalar_lea.sflag [#allocation5], 1
    %970 = vsyncpa %s969, 1

</llo_original>
